<compile_context>
chip_gen: v7x
topology: tpu7x:2x2x1
jax: 0.10.0
libtpu: 0.0.40
codegen_flags: <defaults>
</compile_context>

<pallas_src>
import jax
import jax.numpy as jnp
from jax.experimental import pallas as pl
from jax.experimental.pallas import tpu as pltpu

LN_EPS = 1e-5


def _round_up(x, m):
    return ((x + m - 1) // m) * m


def _cdiv(a, b):
    return -(-a // b)


def _device_defaults():
    """(token_tile, vmem_cap_bytes) tuned per TPU generation."""
    try:
        kind = jax.devices()[0].device_kind.lower()
    except Exception:
        return 256, 64 << 20
    if "v7" in kind:
        # 64 MiB VMEM per TensorCore: smaller tiles, leave headroom.
        return 256, 56 << 20
    # v5e / v6e (and older): 128 MiB physical VMEM.
    return 512, 100 << 20


def _res_block_kernel(x_ref, vec_ref, w1_ref, w2_ref, o_ref):
    """One token tile: LayerNorm -> Linear -> GELU -> Linear -> residual add."""
    x = x_ref[...].astype(jnp.float32)                        # (ts, C)

    vecs = vec_ref[...]                                       # (8, C) f32, VMEM-resident
    gamma = vecs[0:1, :]
    beta = vecs[1:2, :]
    b1 = vecs[2:3, :]
    b2 = vecs[3:4, :]

    # --- LayerNorm over the channel (lane) axis, f32 ---
    mean = jnp.mean(x, axis=-1, keepdims=True)
    xc = x - mean
    var = jnp.mean(xc * xc, axis=-1, keepdims=True)
    xn = xc * jax.lax.rsqrt(var + LN_EPS) * gamma + beta      # (ts, C) f32

    # --- MLP: bf16 operands on the MXU, f32 accumulation / elementwise ---
    h = jnp.dot(xn.astype(jnp.bfloat16), w1_ref[...],
                preferred_element_type=jnp.float32) + b1
    # TODO(synk): PyTorch nn.GELU() defaults to the exact erf GELU; the tanh
    # approximation is used here for robust Mosaic lowering (EUP tanh path).
    h = jax.nn.gelu(h, approximate=True)
    y = jnp.dot(h.astype(jnp.bfloat16), w2_ref[...],
                preferred_element_type=jnp.float32) + b2

    # Single lane-dense store per tile (residual is on the normalized input).
    o_ref[...] = (xn + y).astype(o_ref.dtype)


def simple_res_block(x, params, *, token_tile=None):
    """x: (..., C) -> (..., C). Fused LayerNorm + 2-layer MLP + residual."""
    orig_shape = x.shape
    C = orig_shape[-1]
    tokens = x.reshape(-1, C)
    T = tokens.shape[0]

    default_tile, vmem_cap = _device_defaults()
    if token_tile is None:
        token_tile = default_tile

    # Tile count / size: minimize padding (T_pad - T < ts) and give the
    # "parallel" axis at least two tiles when there is enough work so that
    # both v7x TensorCores are busy.
    n_tiles = max(1, _cdiv(T, token_tile))
    if n_tiles == 1 and T > 16:
        n_tiles = 2
    ts = _round_up(_cdiv(T, n_tiles), 8)
    T_pad = ts * n_tiles
    if T_pad != T:
        tokens = jnp.pad(tokens, ((0, T_pad - T), (0, 0)))

    # Weights in bf16 (MXU-native, half the HBM/VMEM bytes). LN params and
    # biases packed into one (8, C) f32 array -> single padded VMEM tile.
    w1_t = params["w1_t"].astype(jnp.bfloat16)                # (C, C) = W1.T
    w2_t = params["w2_t"].astype(jnp.bfloat16)                # (C, C) = W2.T
    vecs = jnp.concatenate(
        [params["gamma"].reshape(1, C), params["beta"].reshape(1, C),
         params["b1"].reshape(1, C), params["b2"].reshape(1, C),
         jnp.zeros((4, C), jnp.float32)], axis=0).astype(jnp.float32)  # (8, C)

    const = lambda i: (0, 0)                                  # residents: DMA'd once
    x_bytes = jnp.dtype(x.dtype).itemsize

    # Explicit scoped-VMEM budget from actual usage (+headroom), capped per chip.
    need = (2 * 2 * ts * C * x_bytes       # x + out tiles, double-buffered
            + 2 * C * C * 2                # bf16 weights, single-buffered
            + 8 * C * 4                    # packed LN/bias vectors
            + 6 * ts * C * 4)              # f32/bf16 intermediates + slack
    vmem_limit = int(min(max(2 * need, 32 << 20), vmem_cap))

    cost = pl.CostEstimate(
        flops=int(4 * T_pad * C * C),                         # two (ts,C)x(C,C) matmuls
        transcendentals=int(T_pad * C),                       # tanh in GELU
        bytes_accessed=int(2 * T_pad * C * x_bytes + 2 * C * C * 2 + 8 * C * 4),
    )

    out = pl.pallas_call(
        _res_block_kernel,
        out_shape=jax.ShapeDtypeStruct((T_pad, C), x.dtype),
        grid_spec=pltpu.PrefetchScalarGridSpec(
            num_scalar_prefetch=0,
            grid=(n_tiles,),
            in_specs=[
                pl.BlockSpec((ts, C), lambda i: (i, 0)),      # x tile (pipelined)
                pl.BlockSpec((8, C), const,
                             pipeline_mode=pl.Buffered(1)),   # gamma/beta/b1/b2 pack
                pl.BlockSpec((C, C), const,
                             pipeline_mode=pl.Buffered(1)),   # W1^T (bf16, resident)
                pl.BlockSpec((C, C), const,
                             pipeline_mode=pl.Buffered(1)),   # W2^T (bf16, resident)
            ],
            out_specs=pl.BlockSpec((ts, C), lambda i: (i, 0)),
        ),
        compiler_params=pltpu.CompilerParams(
            dimension_semantics=("parallel",),                # token tiles split across cores
            vmem_limit_bytes=vmem_limit),
        cost_estimate=cost,
    )(tokens, vecs, w1_t, w2_t)

    return out[:T].reshape(orig_shape)


def init_params(key, channels):
    k1, k2, k3, k4 = jax.random.split(key, 4)
    scale = 1.0 / jnp.sqrt(jnp.float32(channels))
    # torch.nn.Linear(C, C): y = x @ W.T + b, W is (out, in). Store W.T directly,
    # in bf16 (MXU-native operand dtype).
    w1 = scale * jax.random.normal(k1, (channels, channels), jnp.float32)
    b1 = scale * jax.random.normal(k2, (channels,), jnp.float32)
    w2 = scale * jax.random.normal(k3, (channels, channels), jnp.float32)
    b2 = scale * jax.random.normal(k4, (channels,), jnp.float32)
    return {
        "gamma": jnp.ones((channels,), jnp.float32),          # LayerNorm default init
        "beta": jnp.zeros((channels,), jnp.float32),
        "w1_t": w1.T.astype(jnp.bfloat16), "b1": b1,
        "w2_t": w2.T.astype(jnp.bfloat16), "b2": b2,
    }


def _ref_forward(x, params):
    """Pure-JAX reference mirroring the kernel's numerics (bf16 MXU operands)."""
    x = x.astype(jnp.float32)
    mean = jnp.mean(x, axis=-1, keepdims=True)
    var = jnp.mean((x - mean) ** 2, axis=-1, keepdims=True)
    xn = (x - mean) * jax.lax.rsqrt(var + LN_EPS) * params["gamma"] + params["beta"]
    h = jnp.dot(xn.astype(jnp.bfloat16), params["w1_t"].astype(jnp.bfloat16),
                preferred_element_type=jnp.float32) + params["b1"]
    h = jax.nn.gelu(h, approximate=True)
    y = jnp.dot(h.astype(jnp.bfloat16), params["w2_t"].astype(jnp.bfloat16),
                preferred_element_type=jnp.float32) + params["b2"]
    return (xn + y).astype(x.dtype)


if __name__ == "__main__":
    B, S, C = 2, 8, 128     # channels = 128 (lane-aligned small stand-in)
    key = jax.random.PRNGKey(0)
    kx, kp = jax.random.split(key)
    x = jax.random.normal(kx, (B, S, C), jnp.float32)
    params = init_params(kp, C)

    out = jax.block_until_ready(simple_res_block(x, params))
    assert out.shape == (B, S, C)

    ref = _ref_forward(x, params)
    # Reference uses the same bf16-operand matmuls, so tolerance only needs to
    # cover accumulation-order / EUP-tanh differences.
    assert jnp.allclose(out, ref, atol=1e-2, rtol=1e-2), "kernel mismatch vs reference"

    print("KERNEL_OK")
</pallas_src>

<mosaic_0001>
module attributes {stable_mosaic.version = 11 : i64} {
  func.func @_res_block_kernel(%arg0: i32, %arg1: memref<16x128xf32, #tpu.memory_space<vmem>>, %arg2: memref<8x128xf32, #tpu.memory_space<vmem>>, %arg3: memref<128x128xbf16, #tpu.memory_space<vmem>>, %arg4: memref<128x128xbf16, #tpu.memory_space<vmem>>, %arg5: memref<16x128xf32, #tpu.memory_space<vmem>>) attributes {dimension_semantics = [#tpu.dimension_semantics<parallel>], iteration_bounds = array<i64: 1>, scalar_prefetch = 0 : i64, scratch_operands = 0 : i64, tpu.core_type = #tpu.core_type<tc>, window_params = [{transform_indices = @transform_0, window_bounds = array<i64: 16, 128>}, {pipeline_mode = #tpu.pipeline_mode<synchronous>, transform_indices = @transform_1, window_bounds = array<i64: 8, 128>}, {pipeline_mode = #tpu.pipeline_mode<synchronous>, transform_indices = @transform_2, window_bounds = array<i64: 128, 128>}, {pipeline_mode = #tpu.pipeline_mode<synchronous>, transform_indices = @transform_3, window_bounds = array<i64: 128, 128>}, {transform_indices = @transform_4, window_bounds = array<i64: 16, 128>}]} {
    %c0 = arith.constant 0 : index
    %c0_0 = arith.constant 0 : index
    %0 = vector.load %arg1[%c0, %c0_0] : memref<16x128xf32, #tpu.memory_space<vmem>>, vector<16x128xf32>
    %c0_1 = arith.constant 0 : index
    %c0_2 = arith.constant 0 : index
    %1 = vector.load %arg2[%c0_1, %c0_2] : memref<8x128xf32, #tpu.memory_space<vmem>>, vector<8x128xf32>
    %2 = vector.extract_strided_slice %1 {offsets = [0, 0], sizes = [1, 128], strides = [1, 1]} : vector<8x128xf32> to vector<1x128xf32>
    %3 = vector.extract_strided_slice %1 {offsets = [1, 0], sizes = [1, 128], strides = [1, 1]} : vector<8x128xf32> to vector<1x128xf32>
    %4 = vector.extract_strided_slice %1 {offsets = [2, 0], sizes = [1, 128], strides = [1, 1]} : vector<8x128xf32> to vector<1x128xf32>
    %5 = vector.extract_strided_slice %1 {offsets = [3, 0], sizes = [1, 128], strides = [1, 1]} : vector<8x128xf32> to vector<1x128xf32>
    %cst = arith.constant dense<0.000000e+00> : vector<16xf32>
    %6 = vector.multi_reduction <add>, %0, %cst [1] : vector<16x128xf32> to vector<16xf32>
    %7 = vector.shape_cast %6 : vector<16xf32> to vector<16x1xf32>
    %cst_3 = arith.constant 1.280000e+02 : f32
    %8 = vector.broadcast %cst_3 : f32 to vector<16x1xf32>
    %9 = arith.divf %7, %8 : vector<16x1xf32>
    %10 = vector.broadcast %9 : vector<16x1xf32> to vector<16x128xf32>
    %11 = arith.subf %0, %10 : vector<16x128xf32>
    %12 = arith.mulf %11, %11 : vector<16x128xf32>
    %cst_4 = arith.constant dense<0.000000e+00> : vector<16xf32>
    %13 = vector.multi_reduction <add>, %12, %cst_4 [1] : vector<16x128xf32> to vector<16xf32>
    %14 = vector.shape_cast %13 : vector<16xf32> to vector<16x1xf32>
    %cst_5 = arith.constant 1.280000e+02 : f32
    %15 = vector.broadcast %cst_5 : f32 to vector<16x1xf32>
    %16 = arith.divf %14, %15 : vector<16x1xf32>
    %cst_6 = arith.constant 9.99999974E-6 : f32
    %17 = vector.broadcast %cst_6 : f32 to vector<16x1xf32>
    %18 = arith.addf %16, %17 : vector<16x1xf32>
    %19 = math.rsqrt %18 : vector<16x1xf32>
    %20 = vector.broadcast %19 : vector<16x1xf32> to vector<16x128xf32>
    %21 = arith.mulf %11, %20 : vector<16x128xf32>
    %22 = vector.broadcast %2 : vector<1x128xf32> to vector<16x128xf32>
    %23 = arith.mulf %21, %22 : vector<16x128xf32>
    %24 = vector.broadcast %3 : vector<1x128xf32> to vector<16x128xf32>
    %25 = arith.addf %23, %24 : vector<16x128xf32>
    %26 = arith.truncf %25 : vector<16x128xf32> to vector<16x128xbf16>
    %c0_7 = arith.constant 0 : index
    %c0_8 = arith.constant 0 : index
    %27 = vector.load %arg3[%c0_7, %c0_8] : memref<128x128xbf16, #tpu.memory_space<vmem>>, vector<128x128xbf16>
    %cst_9 = arith.constant dense<0.000000e+00> : vector<16x128xf32>
    %28 = tpu.matmul %26, %27, %cst_9 {dimension_numbers = #tpu.dot_dimension_numbers<[1], [0], [0], [1], [0, 0, 1, 1], [], []>} : vector<16x128xbf16>, vector<128x128xbf16>, vector<16x128xf32> -> vector<16x128xf32>
    %29 = vector.broadcast %4 : vector<1x128xf32> to vector<16x128xf32>
    %30 = arith.addf %28, %29 : vector<16x128xf32>
    %31 = arith.mulf %30, %30 : vector<16x128xf32>
    %32 = arith.mulf %30, %31 : vector<16x128xf32>
    %cst_10 = arith.constant 4.471500e-02 : f32
    %33 = vector.broadcast %cst_10 : f32 to vector<16x128xf32>
    %34 = arith.mulf %33, %32 : vector<16x128xf32>
    %35 = arith.addf %30, %34 : vector<16x128xf32>
    %cst_11 = arith.constant 0.797884583 : f32
    %36 = vector.broadcast %cst_11 : f32 to vector<16x128xf32>
    %37 = arith.mulf %36, %35 : vector<16x128xf32>
    %38 = math.tanh %37 : vector<16x128xf32>
    %cst_12 = arith.constant 1.000000e+00 : f32
    %39 = vector.broadcast %cst_12 : f32 to vector<16x128xf32>
    %40 = arith.addf %39, %38 : vector<16x128xf32>
    %cst_13 = arith.constant 5.000000e-01 : f32
    %41 = vector.broadcast %cst_13 : f32 to vector<16x128xf32>
    %42 = arith.mulf %41, %40 : vector<16x128xf32>
    %43 = arith.mulf %30, %42 : vector<16x128xf32>
    %44 = arith.truncf %43 : vector<16x128xf32> to vector<16x128xbf16>
    %c0_14 = arith.constant 0 : index
    %c0_15 = arith.constant 0 : index
    %45 = vector.load %arg4[%c0_14, %c0_15] : memref<128x128xbf16, #tpu.memory_space<vmem>>, vector<128x128xbf16>
    %cst_16 = arith.constant dense<0.000000e+00> : vector<16x128xf32>
    %46 = tpu.matmul %44, %45, %cst_16 {dimension_numbers = #tpu.dot_dimension_numbers<[1], [0], [0], [1], [0, 0, 1, 1], [], []>} : vector<16x128xbf16>, vector<128x128xbf16>, vector<16x128xf32> -> vector<16x128xf32>
    %47 = vector.broadcast %5 : vector<1x128xf32> to vector<16x128xf32>
    %48 = arith.addf %46, %47 : vector<16x128xf32>
    %49 = arith.addf %25, %48 : vector<16x128xf32>
    %c0_17 = arith.constant 0 : index
    %c0_18 = arith.constant 0 : index
    %50 = vector.load %arg5[%c0_17, %c0_18] : memref<16x128xf32, #tpu.memory_space<vmem>>, vector<16x128xf32>
    tpu.vector_store %arg5[%c0_17, %c0_18], %49 {strides = array<i32>} : memref<16x128xf32, #tpu.memory_space<vmem>>, vector<16x128xf32>,
    return
  }
  func.func @transform_0(%arg0: i32) -> (i32, i32) {
    %c0_i32 = arith.constant 0 : i32
    %c0_i32_0 = arith.constant 0 : i32
    return %arg0, %c0_i32 : i32, i32
  }
  func.func @transform_1(%arg0: i32) -> (i32, i32) {
    %c0_i32 = arith.constant 0 : i32
    %c0_i32_0 = arith.constant 0 : i32
    %c0_i32_1 = arith.constant 0 : i32
    return %c0_i32, %c0_i32_0 : i32, i32
  }
  func.func @transform_2(%arg0: i32) -> (i32, i32) {
    %c0_i32 = arith.constant 0 : i32
    %c0_i32_0 = arith.constant 0 : i32
    %c0_i32_1 = arith.constant 0 : i32
    return %c0_i32, %c0_i32_0 : i32, i32
  }
  func.func @transform_3(%arg0: i32) -> (i32, i32) {
    %c0_i32 = arith.constant 0 : i32
    %c0_i32_0 = arith.constant 0 : i32
    %c0_i32_1 = arith.constant 0 : i32
    return %c0_i32, %c0_i32_0 : i32, i32
  }
  func.func @transform_4(%arg0: i32) -> (i32, i32) {
    %c0_i32 = arith.constant 0 : i32
    %c0_i32_0 = arith.constant 0 : i32
    return %arg0, %c0_i32 : i32, i32
  }
}

</mosaic_0001>

<llo_original>
// kernel: tpu_custom_call.1
$region0: #{tpu_custom_call.1}
  #allocation0 [shape = 'u32[]', space=smem, size = 0x4, offset = 0x4, fixed_abs, tag = 'smem constant byte address 0x4 - core index']
  #allocation1 [shape = 'u32[144,128]{1,0:T(1,128)}', space=vmem, size = 0x12000, scoped, tag = 'internal scratch']
  %s0 = inlined_call_operand.hbm [shape: f32[16,128], index: 0, kind: input, shape index: {}]
  %s1 = inlined_call_operand.hbm [shape: f32[8,128], index: 1, kind: input, shape index: {}]
  %s2 = inlined_call_operand.hbm [shape: bf16[128,128], index: 2, kind: input, shape index: {}]
  %s3 = inlined_call_operand.hbm [shape: bf16[128,128], index: 3, kind: input, shape index: {}]
  %s4 = inlined_call_operand.hbm [shape: f32[16,128], index: 4, kind: output, shape index: {}]
  %s5 = sld [smem:[#allocation0]]
  $region42: #{tpu_custom_call.1} parent=0
    _
  %s7 = ssub.s32 1, %s5
  %s8 = scalar_select 0, %s7, %s5
  $region1: #{tpu_custom_call.1} parent=0
    #allocation2 [shape = 'u8[8192]{0}', space=vmem, size = 0x2000, scoped, tag = 'input window, operand 0, single buffered']
    #allocation3 [shape = 's32[1]{0}', space=sflag, size = 0x4, scoped, tag = 'scoped memory for tpu_custom_call.1']
    #allocation4 [shape = 's32[1]{0}', space=sflag, size = 0x4, scoped, tag = 'scoped memory for tpu_custom_call.1']
    #allocation5 [shape = 'u8[4096]{0}', space=vmem, size = 0x1000, scoped, tag = 'input window, operand 1, single buffered']
    #allocation6 [shape = 's32[1]{0}', space=sflag, size = 0x4, scoped, tag = 'scoped memory for tpu_custom_call.1']
    #allocation7 [shape = 'u8[32768]{0}', space=vmem, size = 0x8000, scoped, tag = 'input window, operand 2, single buffered']
    #allocation8 [shape = 'u8[32768]{0}', space=vmem, size = 0x8000, scoped, tag = 'input window, operand 3, single buffered']
    #allocation9 [shape = 's32[1]{0}', space=sflag, size = 0x4, scoped, tag = 'scoped memory for tpu_custom_call.1']
    #allocation10 [shape = 'u8[8192]{0}', space=vmem, size = 0x2000, scoped, tag = 'output window, operand 0, single buffered']
    %9 = vsyncpa [#allocation3], 0
    %10 = vsyncpa [#allocation6], 0
    %11 = vsyncpa [#allocation9], 0
    %12 = vsyncpa [#allocation4], 0
    // Predicated region
    $region2: #{tpu_custom_call.1} parent=1 // pred_check
      _
    $region3: #{tpu_custom_call.1} parent=1 // pred_check_branch
      %14 = sbr.rel (0) target = $region5
    $region4: #{tpu_custom_call.1} parent=1 // pred_region
      %s16 = ssub.s32 256, 256
      %17 = vsyncadd [#allocation3], %s16
      %s18 = sshll.u32 [#allocation2], 4
      %s19 = int_to_ptr.vmem [resolvable:$true] %s18
      %24 = dma.hbm_to_vmem [thread:$0]  %s0, 256, %s19, [#allocation3], 128, 128, 8
    $region5: #{tpu_custom_call.1} parent=1 // pred_fallthru
      _
    // Predicated region
    $region6: #{tpu_custom_call.1} parent=1 // pred_check
      _
    $region7: #{tpu_custom_call.1} parent=1 // pred_check_branch
      %26 = sbr.rel (0) target = $region9
    $region8: #{tpu_custom_call.1} parent=1 // pred_region
      %s28 = ssub.s32 128, 128
      %29 = vsyncadd [#allocation6], %s28
      %s31 = sshll.u32 [#allocation5], 4
      %s32 = int_to_ptr.vmem [resolvable:$true] %s31
      %34 = dma.hbm_to_vmem [thread:$0]  %s1, 128, %s32, [#allocation6]
    $region9: #{tpu_custom_call.1} parent=1 // pred_fallthru
      _
    // Predicated region
    $region10: #{tpu_custom_call.1} parent=1 // pred_check
      _
    $region11: #{tpu_custom_call.1} parent=1 // pred_check_branch
      %36 = sbr.rel (0) target = $region13
    $region12: #{tpu_custom_call.1} parent=1 // pred_region
      %s38 = ssub.s32 1024, 1024
      %39 = vsyncadd [#allocation6], %s38
      %s40 = sshll.u32 [#allocation7], 4
      %s41 = int_to_ptr.vmem [resolvable:$true] %s40
      %46 = dma.hbm_to_vmem [thread:$0]  %s2, 1024, %s41, [#allocation6], 64, 64, 4
    $region13: #{tpu_custom_call.1} parent=1 // pred_fallthru
      _
    // Predicated region
    $region14: #{tpu_custom_call.1} parent=1 // pred_check
      _
    $region15: #{tpu_custom_call.1} parent=1 // pred_check_branch
      %48 = sbr.rel (0) target = $region17
    $region16: #{tpu_custom_call.1} parent=1 // pred_region
      %s50 = ssub.s32 1024, 1024
      %51 = vsyncadd [#allocation9], %s50
      %s52 = sshll.u32 [#allocation8], 4
      %s53 = int_to_ptr.vmem [resolvable:$true] %s52
      %58 = dma.hbm_to_vmem [thread:$0]  %s3, 1024, %s53, [#allocation9], 64, 64, 4
    $region17: #{tpu_custom_call.1} parent=1 // pred_fallthru
      _
    // Predicated region
    $region18: #{tpu_custom_call.1} parent=1 // pred_check
      _
    $region19: #{tpu_custom_call.1} parent=1 // pred_check_branch
      %60 = sbr.rel (0) target = $region21
    $region20: #{tpu_custom_call.1} parent=1 // pred_region
      %61 = dma.done [#allocation3], 256
    $region21: #{tpu_custom_call.1} parent=1 // pred_fallthru
      _
    // Predicated region
    $region22: #{tpu_custom_call.1} parent=1 // pred_check
      _
    $region23: #{tpu_custom_call.1} parent=1 // pred_check_branch
      %63 = sbr.rel (0) target = $region25
    $region24: #{tpu_custom_call.1} parent=1 // pred_region
      %64 = dma.done [#allocation6], 128
    $region25: #{tpu_custom_call.1} parent=1 // pred_fallthru
      _
    // Predicated region
    $region26: #{tpu_custom_call.1} parent=1 // pred_check
      _
    $region27: #{tpu_custom_call.1} parent=1 // pred_check_branch
      %66 = sbr.rel (0) target = $region29
    $region28: #{tpu_custom_call.1} parent=1 // pred_region
      %67 = dma.done [#allocation6], 1024
    $region29: #{tpu_custom_call.1} parent=1 // pred_fallthru
      _
    // Predicated region
    $region30: #{tpu_custom_call.1} parent=1 // pred_check
      _
    $region31: #{tpu_custom_call.1} parent=1 // pred_check_branch
      %69 = sbr.rel (0) target = $region33
    $region32: #{tpu_custom_call.1} parent=1 // pred_region
      %70 = dma.done [#allocation9], 1024
    $region33: #{tpu_custom_call.1} parent=1 // pred_fallthru
      _
    %v72 = vld [vmem:[#allocation2] sm:$0xff]
    %v73 = vld [vmem:[#allocation2 + $0x8] sm:$0xff]
    %v74 = vld [vmem:[#allocation5] sm:$0xff]
    %75 = vadd.xlane.f32.xlu0 %v72
    %v76 = vpop.xlane.xlu0 %75
    %77 = vadd.xlane.f32.xlu0 %v73
    %v78 = vpop.xlane.xlu0 %77
    %v79 = vrcp.pop 128.0
    %v80 = vmul.f32 %v76, %v79
    %v81 = vmul.f32 %v78, %v79
    %v82 = vsub.f32 %v72, %v80
    %v83 = vsub.f32 %v73, %v81
    %v84 = vmul.f32 %v82, %v82
    %v85 = vmul.f32 %v83, %v83
    %86 = vadd.xlane.f32.xlu0 %v84
    %v87 = vpop.xlane.xlu0 %86
    %88 = vadd.xlane.f32.xlu0 %v85
    %v89 = vpop.xlane.xlu0 %88
    %v90 = vmul.f32 %v87, %v79
    %v91 = vmul.f32 %v89, %v79
    %v92 = vadd.f32 %v90, 1e-05
    %v93 = vadd.f32 %v91, 1e-05
    %v94 = vrsqrt.pop %v92
    %v95 = vrsqrt.pop %v93
    %v96 = vmul.f32 %v82, %v94
    %v97 = vmul.f32 %v83, %v95
    %v98 = vlaneseq
    %v99 = vshrl.u32 %v98, 7
    %v100 = vsub.s32 0, %v99
    %v101 = vrot.slane %v74, %v100
    %v102 = vmul.f32 %v96, %v101
    %v103 = vmul.f32 %v97, %v101
    %v104 = vlaneseq
    %v105 = vshrl.u32 %v104, 7
    %v106 = vsub.s32 1, %v105
    %v107 = vrot.slane %v74, %v106
    %v108 = vadd.f32 %v102, %v107
    %v109 = vadd.f32 %v103, %v107
    %v110 = vpack.c.bf16 %v109, %v108
    %v111 = vld [vmem:[#allocation7] sm:$0xf]
    %v112 = vld [vmem:[#allocation7 + $0x4] sm:$0xf]
    %v113 = vld [vmem:[#allocation7 + $0x8] sm:$0xf]
    %v114 = vld [vmem:[#allocation7 + $0xc] sm:$0xf]
    %v115 = vld [vmem:[#allocation7 + $0x10] sm:$0xf]
    %v116 = vld [vmem:[#allocation7 + $0x14] sm:$0xf]
    %v117 = vld [vmem:[#allocation7 + $0x18] sm:$0xf]
    %v118 = vld [vmem:[#allocation7 + $0x1c] sm:$0xf]
    %v119 = vld [vmem:[#allocation7 + $0x20] sm:$0xf]
    %v120 = vld [vmem:[#allocation7 + $0x24] sm:$0xf]
    %v121 = vld [vmem:[#allocation7 + $0x28] sm:$0xf]
    %v122 = vld [vmem:[#allocation7 + $0x2c] sm:$0xf]
    %v123 = vld [vmem:[#allocation7 + $0x30] sm:$0xf]
    %v124 = vld [vmem:[#allocation7 + $0x34] sm:$0xf]
    %v125 = vld [vmem:[#allocation7 + $0x38] sm:$0xf]
    %v126 = vld [vmem:[#allocation7 + $0x3c] sm:$0xf]
    %v127 = vlaneseq
    %v128 = vshrl.u32 %v127, 7
    %v129 = vsub.s32 2, %v128
    %v130 = vrot.slane %v74, %v129
    %v147 = vunpack.c.l.b16 %v111
    %v148 = vunpack.c.l.b16 %v112
    %v149 = vunpack.c.l.b16 %v113
    %v150 = vunpack.c.l.b16 %v114
    %v151 = vunpack.c.l.b16 %v115
    %v152 = vunpack.c.l.b16 %v116
    %v153 = vunpack.c.l.b16 %v117
    %v154 = vunpack.c.l.b16 %v118
    %v155 = vunpack.c.l.b16 %v119
    %v156 = vunpack.c.l.b16 %v120
    %v157 = vunpack.c.l.b16 %v121
    %v158 = vunpack.c.l.b16 %v122
    %v159 = vunpack.c.l.b16 %v123
    %v160 = vunpack.c.l.b16 %v124
    %v161 = vunpack.c.l.b16 %v125
    %v162 = vunpack.c.l.b16 %v126
    %v163 = vpack.c.b16 %v148, %v147
    %v164 = vpack.c.b16 %v150, %v149
    %v165 = vpack.c.b16 %v152, %v151
    %v166 = vpack.c.b16 %v154, %v153
    %v167 = vpack.c.b16 %v156, %v155
    %v168 = vpack.c.b16 %v158, %v157
    %v169 = vpack.c.b16 %v160, %v159
    %v170 = vpack.c.b16 %v162, %v161
    %179 = vmatprep.subr.bf16.mxu0 0
    %180 = vmatpush1.bf16.msra.mxu0 %v163
    %181 = vmatprep.subr.bf16.mxu0 0
    %182 = vmatpush1.bf16.msra.mxu0 %v164
    %183 = vmatprep.subr.bf16.mxu0 0
    %184 = vmatpush1.bf16.msra.mxu0 %v165
    %185 = vmatprep.subr.bf16.mxu0 0
    %186 = vmatpush1.bf16.msra.mxu0 %v166
    %187 = vmatprep.subr.bf16.mxu0 0
    %188 = vmatpush1.bf16.msra.mxu0 %v167
    %189 = vmatprep.subr.bf16.mxu0 0
    %190 = vmatpush1.bf16.msra.mxu0 %v168
    %191 = vmatprep.subr.bf16.mxu0 0
    %192 = vmatpush1.bf16.msra.mxu0 %v169
    %193 = vmatprep.subr.bf16.mxu0 0
    %194 = vmatpush1.bf16.msra.mxu0 %v170
    %195 = vmatprep.subr.bf16.mxu0 0
    %196 = vmatpush1.bf16.msra.mxu0 0
    %197 = vmatprep.subr.bf16.mxu0 0
    %198 = vmatpush1.bf16.msra.mxu0 0
    %199 = vmatprep.subr.bf16.mxu0 0
    %200 = vmatpush1.bf16.msra.mxu0 0
    %201 = vmatprep.subr.bf16.mxu0 0
    %202 = vmatpush1.bf16.msra.mxu0 0
    %203 = vmatprep.subr.bf16.mxu0 0
    %204 = vmatpush1.bf16.msra.mxu0 0
    %205 = vmatprep.subr.bf16.mxu0 0
    %206 = vmatpush1.bf16.msra.mxu0 0
    %207 = vmatprep.subr.bf16.mxu0 0
    %208 = vmatpush1.bf16.msra.mxu0 0
    %209 = vmatprep.subr.bf16.mxu0 0
    %210 = vmatpush1.bf16.msra.mxu0 0
    %211 = vmatprep.mubr.bf16.mxu0 0
    %212 = vmatmul.mubr.bf16.gmra.mrb[0].mxu0 %v110
    %v213 = vpop.f32.mrb[0].mxu0
    %v214 = vadd.f32 %v130, %v213
    %v215 = vpop.f32.mrb[0].mxu0
    %v216 = vpop.f32.mrb[0].mxu0
    %v217 = vadd.f32 %v130, %v216
    %v218 = vpop.f32.mrb[0].mxu0
    %219 = vdwg.mxu0
    %v220 = vmul.f32 %v214, %v214
    %v221 = vmul.f32 %v217, %v217
    %v222 = vmul.f32 %v214, %v220
    %v223 = vmul.f32 %v217, %v221
    %v224 = vmul.f32 %v222, 0.044715
    %v225 = vmul.f32 %v223, 0.044715
    %v226 = vadd.f32 %v214, %v224
    %v227 = vadd.f32 %v217, %v225
    %v228 = vmul.f32 %v226, 0.7978846
    %v229 = vmul.f32 %v227, 0.7978846
    %v230 = vtanh.pop %v228
    %v231 = vtanh.pop %v229
    %v232 = vadd.f32 %v230, 1.0
    %v233 = vadd.f32 %v231, 1.0
    %v234 = vmul.f32 %v232, 0.5
    %v235 = vmul.f32 %v233, 0.5
    %v236 = vmul.f32 %v214, %v234
    %v237 = vmul.f32 %v217, %v235
    %v238 = vpack.c.bf16 %v237, %v236
    %v239 = vld [vmem:[#allocation8] sm:$0xf]
    %v240 = vld [vmem:[#allocation8 + $0x4] sm:$0xf]
    %v241 = vld [vmem:[#allocation8 + $0x8] sm:$0xf]
    %v242 = vld [vmem:[#allocation8 + $0xc] sm:$0xf]
    %v243 = vld [vmem:[#allocation8 + $0x10] sm:$0xf]
    %v244 = vld [vmem:[#allocation8 + $0x14] sm:$0xf]
    %v245 = vld [vmem:[#allocation8 + $0x18] sm:$0xf]
    %v246 = vld [vmem:[#allocation8 + $0x1c] sm:$0xf]
    %v247 = vld [vmem:[#allocation8 + $0x20] sm:$0xf]
    %v248 = vld [vmem:[#allocation8 + $0x24] sm:$0xf]
    %v249 = vld [vmem:[#allocation8 + $0x28] sm:$0xf]
    %v250 = vld [vmem:[#allocation8 + $0x2c] sm:$0xf]
    %v251 = vld [vmem:[#allocation8 + $0x30] sm:$0xf]
    %v252 = vld [vmem:[#allocation8 + $0x34] sm:$0xf]
    %v253 = vld [vmem:[#allocation8 + $0x38] sm:$0xf]
    %v254 = vld [vmem:[#allocation8 + $0x3c] sm:$0xf]
    %v255 = vlaneseq
    %v256 = vshrl.u32 %v255, 7
    %v257 = vsub.s32 3, %v256
    %v258 = vrot.slane %v74, %v257
    %v275 = vunpack.c.l.b16 %v239
    %v276 = vunpack.c.l.b16 %v240
    %v277 = vunpack.c.l.b16 %v241
    %v278 = vunpack.c.l.b16 %v242
    %v279 = vunpack.c.l.b16 %v243
    %v280 = vunpack.c.l.b16 %v244
    %v281 = vunpack.c.l.b16 %v245
    %v282 = vunpack.c.l.b16 %v246
    %v283 = vunpack.c.l.b16 %v247
    %v284 = vunpack.c.l.b16 %v248
    %v285 = vunpack.c.l.b16 %v249
    %v286 = vunpack.c.l.b16 %v250
    %v287 = vunpack.c.l.b16 %v251
    %v288 = vunpack.c.l.b16 %v252
    %v289 = vunpack.c.l.b16 %v253
    %v290 = vunpack.c.l.b16 %v254
    %v291 = vpack.c.b16 %v276, %v275
    %v292 = vpack.c.b16 %v278, %v277
    %v293 = vpack.c.b16 %v280, %v279
    %v294 = vpack.c.b16 %v282, %v281
    %v295 = vpack.c.b16 %v284, %v283
    %v296 = vpack.c.b16 %v286, %v285
    %v297 = vpack.c.b16 %v288, %v287
    %v298 = vpack.c.b16 %v290, %v289
    %307 = vmatprep.subr.bf16.mxu0 0
    %308 = vmatpush1.bf16.msra.mxu0 %v291
    %309 = vmatprep.subr.bf16.mxu0 0
    %310 = vmatpush1.bf16.msra.mxu0 %v292
    %311 = vmatprep.subr.bf16.mxu0 0
    %312 = vmatpush1.bf16.msra.mxu0 %v293
    %313 = vmatprep.subr.bf16.mxu0 0
    %314 = vmatpush1.bf16.msra.mxu0 %v294
    %315 = vmatprep.subr.bf16.mxu0 0
    %316 = vmatpush1.bf16.msra.mxu0 %v295
    %317 = vmatprep.subr.bf16.mxu0 0
    %318 = vmatpush1.bf16.msra.mxu0 %v296
    %319 = vmatprep.subr.bf16.mxu0 0
    %320 = vmatpush1.bf16.msra.mxu0 %v297
    %321 = vmatprep.subr.bf16.mxu0 0
    %322 = vmatpush1.bf16.msra.mxu0 %v298
    %323 = vmatprep.subr.bf16.mxu0 0
    %324 = vmatpush1.bf16.msra.mxu0 0
    %325 = vmatprep.subr.bf16.mxu0 0
    %326 = vmatpush1.bf16.msra.mxu0 0
    %327 = vmatprep.subr.bf16.mxu0 0
    %328 = vmatpush1.bf16.msra.mxu0 0
    %329 = vmatprep.subr.bf16.mxu0 0
    %330 = vmatpush1.bf16.msra.mxu0 0
    %331 = vmatprep.subr.bf16.mxu0 0
    %332 = vmatpush1.bf16.msra.mxu0 0
    %333 = vmatprep.subr.bf16.mxu0 0
    %334 = vmatpush1.bf16.msra.mxu0 0
    %335 = vmatprep.subr.bf16.mxu0 0
    %336 = vmatpush1.bf16.msra.mxu0 0
    %337 = vmatprep.subr.bf16.mxu0 0
    %338 = vmatpush1.bf16.msra.mxu0 0
    %339 = vmatprep.mubr.bf16.mxu0 0
    %340 = vmatmul.mubr.bf16.gmra.mrb[0].mxu0 %v238
    %v341 = vpop.f32.mrb[0].mxu0
    %v342 = vadd.f32 %v258, %v341
    %v343 = vpop.f32.mrb[0].mxu0
    %v344 = vpop.f32.mrb[0].mxu0
    %v345 = vadd.f32 %v258, %v344
    %v346 = vpop.f32.mrb[0].mxu0
    %347 = vdwg.mxu0
    %v348 = vadd.f32 %v108, %v342
    %v349 = vadd.f32 %v109, %v345
    %350 = vst [vmem:[#allocation10] sm:$0xff] %v348
    %351 = vst [vmem:[#allocation10 + $0x8] sm:$0xff] %v349
    // Predicated region
    $region34: #{tpu_custom_call.1} parent=1 // pred_check
      _
    $region35: #{tpu_custom_call.1} parent=1 // pred_check_branch
      %353 = sbr.rel (0) target = $region37
    $region36: #{tpu_custom_call.1} parent=1 // pred_region
      %s355 = ssub.s32 256, 256
      %356 = vsyncadd [#allocation4], %s355
      %s357 = sshll.u32 [#allocation10], 4
      %s358 = int_to_ptr.vmem [resolvable:$true] %s357
      %363 = dma.vmem_to_hbm [thread:$0]  %s358, 256, %s4, [#allocation4], 128, 128, 8
    $region37: #{tpu_custom_call.1} parent=1 // pred_fallthru
      _
    // Predicated region
    $region38: #{tpu_custom_call.1} parent=1 // pred_check
      _
    $region39: #{tpu_custom_call.1} parent=1 // pred_check_branch
      %365 = sbr.rel (0) target = $region41
    $region40: #{tpu_custom_call.1} parent=1 // pred_region
      %366 = dma.done [#allocation4], 256
    $region41: #{tpu_custom_call.1} parent=1 // pred_fallthru
      _
    %367 = vsyncpa [#allocation3], 1
    %368 = vsyncpa [#allocation6], 1
    %369 = vsyncpa [#allocation9], 1
    %370 = vsyncpa [#allocation4], 1

</llo_original>
